<compile_context>
chip_gen: v6e
topology: v6e:2x2x1
jax: 0.10.0
libtpu: 0.0.40
codegen_flags: <defaults>
</compile_context>

<pallas_src>
import jax
import jax.numpy as jnp
from jax import lax
from jax.experimental import pallas as pl
from jax.experimental.pallas import tpu as pltpu

# ---- "config" constants (synthetic, small) ----------------------------------
EMBED_DIM = 32
CHEM_FINGERPRINT_SIZE = 64
NUM_NODE = 64            # numNode -> embedding table has NUM_NODE + 1 rows


# ---- fused Pallas kernel -----------------------------------------------------
def _onehot_gather_kernel(table_ref, idx_ref, out_ref):
    """out[i, :] = table[idx[i], :] via one-hot @ table on the MXU."""
    tab = table_ref[...]                              # (V, D)  f32, resident in VMEM
    idx = idx_ref[...]                                # (N, 1)  int32
    n_out = out_ref.shape[0]
    v = table_ref.shape[0]
    node_ids = lax.broadcasted_iota(jnp.int32, (n_out, v), dimension=1)
    onehot = (node_ids == idx).astype(tab.dtype)      # (N, V)  built on the VPU
    out_ref[...] = jnp.dot(
        onehot, tab, preferred_element_type=jnp.float32
    ).astype(out_ref.dtype)                           # single MXU pass + slab store


def _net1_fused_gather(table, x_idx, drug_idx, se_idx):
    """Returns (drug_emb, se_emb, x_emb) with a single fused Pallas kernel."""
    V, D = table.shape
    n = x_idx.shape[0]
    nd = drug_idx.shape[0]
    ns = se_idx.shape[0]
    n_total = n + nd + ns

    x_idx = jnp.clip(x_idx.astype(jnp.int32), 0, V - 1)
    # Compose indices in the wrapper: drug/se rows are just table rows too.
    drug_global = x_idx[drug_idx.astype(jnp.int32)]
    se_global = x_idx[se_idx.astype(jnp.int32)]

    # One index column -> one gather -> one output slab.
    all_idx = jnp.concatenate([x_idx, drug_global, se_global]).reshape(n_total, 1)

    slab = pl.pallas_call(
        _onehot_gather_kernel,
        out_shape=jax.ShapeDtypeStruct((n_total, D), table.dtype),
        grid=(1,),
        in_specs=[
            pl.BlockSpec((V, D), lambda i: (0, 0)),         # full table in VMEM
            pl.BlockSpec((n_total, 1), lambda i: (0, 0)),   # index column in VMEM
        ],
        out_specs=pl.BlockSpec((n_total, D), lambda i: (0, 0)),
        compiler_params=pltpu.CompilerParams(
            dimension_semantics=("arbitrary",)),
    )(table, all_idx)

    x_emb = slab[:n]
    drug_embedding = slab[n:n + nd]
    se_embedding = slab[n + nd:]
    return drug_embedding, se_embedding, x_emb


# ---- Net1 parameters & forward ----------------------------------------------
def init_net1_params(key, num_node=NUM_NODE, embed_dim=EMBED_DIM):
    # nodesEmbedding.weight.data.uniform_(0.001, 0.3)
    w = jax.random.uniform(
        key, (num_node + 1, embed_dim), dtype=jnp.float32,
        minval=0.001, maxval=0.3)
    # TODO(synk): SAGEConv / Linear (conv*, L1, L2, linear1, linear2) weights are
    # declared in __init__ but unused by forward(); omitted here.
    return {"nodes_embedding": w}


def net1_forward(params, x, edge_index, drugNodes, seNodes, drugFeatures):
    # edge_index / drugFeatures are unused by the reference forward().
    del edge_index, drugFeatures
    drug_embedding, se_embedding, x_emb = _net1_fused_gather(
        params["nodes_embedding"], x, drugNodes, seNodes)
    return drug_embedding, se_embedding, x_emb


# ---- reference (pure JAX) for verification -----------------------------------
def net1_forward_ref(params, x, edge_index, drugNodes, seNodes, drugFeatures):
    emb = params["nodes_embedding"]
    x_emb = emb[x]
    return x_emb[drugNodes], x_emb[seNodes], x_emb


if __name__ == "__main__":
    key = jax.random.PRNGKey(0)
    k_emb, k_x, k_drug, k_se, k_feat = jax.random.split(key, 5)

    params = init_net1_params(k_emb)

    N_NODES_IN_GRAPH = 16
    N_DRUG = 8
    N_SE = 8

    # Node ids (indices into the embedding table).
    x = jax.random.randint(k_x, (N_NODES_IN_GRAPH,), 0, NUM_NODE + 1,
                           dtype=jnp.int32)
    # Edge index (unused by forward, kept for signature fidelity).
    edge_index = jax.random.randint(key, (2, 20), 0, N_NODES_IN_GRAPH,
                                    dtype=jnp.int32)
    # drugNodes / seNodes index into positions of the gathered x embedding.
    drugNodes = jax.random.randint(k_drug, (N_DRUG,), 0, N_NODES_IN_GRAPH,
                                   dtype=jnp.int32)
    seNodes = jax.random.randint(k_se, (N_SE,), 0, N_NODES_IN_GRAPH,
                                 dtype=jnp.int32)
    drugFeatures = jax.random.normal(
        k_feat, (N_DRUG, CHEM_FINGERPRINT_SIZE), dtype=jnp.float32)

    out = net1_forward(params, x, edge_index, drugNodes, seNodes, drugFeatures)
    out = jax.block_until_ready(out)

    ref = net1_forward_ref(params, x, edge_index, drugNodes, seNodes,
                           drugFeatures)
    for o, r in zip(out, ref):
        assert o.shape == r.shape and o.dtype == r.dtype
        assert jnp.allclose(o, r), "mismatch vs reference"

    print("KERNEL_OK")
</pallas_src>

<mosaic_0001>
module attributes {stable_mosaic.version = 11 : i64} {
  func.func @_onehot_gather_kernel(%arg0: i32, %arg1: memref<65x32xf32, #tpu.memory_space<vmem>>, %arg2: memref<32x1xi32, #tpu.memory_space<vmem>>, %arg3: memref<32x32xf32, #tpu.memory_space<vmem>>) attributes {dimension_semantics = [#tpu.dimension_semantics<arbitrary>], iteration_bounds = array<i64: 1>, scalar_prefetch = 0 : i64, scratch_operands = 0 : i64, tpu.core_type = #tpu.core_type<tc>, window_params = [{pipeline_mode = #tpu.pipeline_mode<synchronous>, transform_indices = @transform_0, window_bounds = array<i64: 65, 32>}, {pipeline_mode = #tpu.pipeline_mode<synchronous>, transform_indices = @transform_1, window_bounds = array<i64: 32, 1>}, {pipeline_mode = #tpu.pipeline_mode<synchronous>, transform_indices = @transform_2, window_bounds = array<i64: 32, 32>}]} {
    %c0 = arith.constant 0 : index
    %c0_0 = arith.constant 0 : index
    %0 = vector.load %arg1[%c0, %c0_0] : memref<65x32xf32, #tpu.memory_space<vmem>>, vector<65x32xf32>
    %c0_1 = arith.constant 0 : index
    %c0_2 = arith.constant 0 : index
    %1 = vector.load %arg2[%c0_1, %c0_2] : memref<32x1xi32, #tpu.memory_space<vmem>>, vector<32x1xi32>
    %2 = tpu.iota {dimensions = array<i32: 1>} : vector<32x65xi32>
    %3 = vector.broadcast %1 : vector<32x1xi32> to vector<32x65xi32>
    %4 = arith.cmpi eq, %2, %3 : vector<32x65xi32>
    %5 = arith.extui %4 : vector<32x65xi1> to vector<32x65xi32>
    %6 = arith.sitofp %5 : vector<32x65xi32> to vector<32x65xf32>
    %cst = arith.constant dense<0.000000e+00> : vector<32x32xf32>
    %7 = tpu.matmul %6, %0, %cst {dimension_numbers = #tpu.dot_dimension_numbers<[1], [0], [0], [1], [0, 0, 1, 1], [], []>} : vector<32x65xf32>, vector<65x32xf32>, vector<32x32xf32> -> vector<32x32xf32>
    %c0_3 = arith.constant 0 : index
    %c0_4 = arith.constant 0 : index
    %8 = vector.load %arg3[%c0_3, %c0_4] : memref<32x32xf32, #tpu.memory_space<vmem>>, vector<32x32xf32>
    tpu.vector_store %arg3[%c0_3, %c0_4], %7 {strides = array<i32>} : memref<32x32xf32, #tpu.memory_space<vmem>>, vector<32x32xf32>,
    return
  }
  func.func @transform_0(%arg0: i32) -> (i32, i32) {
    %c0_i32 = arith.constant 0 : i32
    %c0_i32_0 = arith.constant 0 : i32
    %c0_i32_1 = arith.constant 0 : i32
    return %c0_i32, %c0_i32_0 : i32, i32
  }
  func.func @transform_1(%arg0: i32) -> (i32, i32) {
    %c0_i32 = arith.constant 0 : i32
    %c0_i32_0 = arith.constant 0 : i32
    %c0_i32_1 = arith.constant 0 : i32
    return %c0_i32, %c0_i32_0 : i32, i32
  }
  func.func @transform_2(%arg0: i32) -> (i32, i32) {
    %c0_i32 = arith.constant 0 : i32
    %c0_i32_0 = arith.constant 0 : i32
    %c0_i32_1 = arith.constant 0 : i32
    return %c0_i32, %c0_i32_0 : i32, i32
  }
}

</mosaic_0001>

<llo_original>
// kernel: tpu_custom_call.1
$region0: #{tpu_custom_call.1}
  #allocation0 [shape = 'u32[]', space=smem, size = 0x4, offset = 0x4, fixed_abs, tag = 'smem constant byte address 0x4 - core index']
  #allocation1 [shape = 'u32[144,128]{1,0:T(1,128)}', space=vmem, size = 0x12000, scoped, tag = 'internal scratch']
  %s0 = inlined_call_operand.vmem [shape: f32[65,32], index: 0, kind: input, shape index: {}]
  %s1 = inlined_call_operand.vmem [shape: s32[32,1], index: 1, kind: input, shape index: {}]
  %s2 = inlined_call_operand.hbm [shape: f32[32,32], index: 2, kind: output, shape index: {}]
  %s3 = sld [smem:[#allocation0]]
  $region18: #{tpu_custom_call.1} parent=0
    _
  %s5 = ssub.s32 1, %s3
  %s6 = scalar_select 0, %s5, %s3
  $region1: #{tpu_custom_call.1} parent=0
    #allocation2 [shape = 'u8[16384]{0}', space=vmem, size = 0x4000, scoped, tag = 'output window, operand 0, single buffered']
    #allocation3 [shape = 's32[1]{0}', space=sflag, size = 0x4, scoped, tag = 'scoped memory for tpu_custom_call.1']
    %7 = vsyncpa [#allocation3], 0
    // Predicated region
    $region2: #{tpu_custom_call.1} parent=1 // pred_check
      _
    $region3: #{tpu_custom_call.1} parent=1 // pred_check_branch
      %9 = sbr.rel (0) target = $region5
    $region4: #{tpu_custom_call.1} parent=1 // pred_region
      _
    $region5: #{tpu_custom_call.1} parent=1 // pred_fallthru
      _
    // Predicated region
    $region6: #{tpu_custom_call.1} parent=1 // pred_check
      _
    $region7: #{tpu_custom_call.1} parent=1 // pred_check_branch
      %11 = sbr.rel (0) target = $region9
    $region8: #{tpu_custom_call.1} parent=1 // pred_region
      _
    $region9: #{tpu_custom_call.1} parent=1 // pred_fallthru
      _
    %v12 = vld [vmem:[%s0] sm:$0xff]
    %v13 = vld [vmem:[%s0 + $0x8] sm:$0xff]
    %v14 = vld [vmem:[%s0 + $0x10] sm:$0xff]
    %v15 = vld [vmem:[%s0 + $0x18] sm:$0xff]
    %v16 = vld [vmem:[%s0 + $0x20] sm:$0xff]
    %v17 = vld [vmem:[%s0 + $0x28] sm:$0xff]
    %v18 = vld [vmem:[%s0 + $0x30] sm:$0xff]
    %v19 = vld [vmem:[%s0 + $0x38] sm:$0xff]
    %v20 = vld [vmem:[%s0 + $0x40] sm:$0x1]
    %v21 = vld [vmem:[%s1] sm:$0xff]
    %v22 = vld [vmem:[%s1 + $0x8] sm:$0xff]
    %v23 = vld [vmem:[%s1 + $0x10] sm:$0xff]
    %v24 = vld [vmem:[%s1 + $0x18] sm:$0xff]
    %v25 = vlaneseq
    %v26 = vand.u32 %v25, 127
    %27 = vset.pattern.permute.xlu0 0
    %28 = vperm.xlu0 %27, %v21
    %v29 = vpop.permute.xlu0 %28
    %30 = vset.pattern.permute.xlu0 0
    %31 = vperm.xlu0 %30, %v22
    %v32 = vpop.permute.xlu0 %31
    %33 = vset.pattern.permute.xlu0 0
    %34 = vperm.xlu0 %33, %v23
    %v35 = vpop.permute.xlu0 %34
    %36 = vset.pattern.permute.xlu0 0
    %37 = vperm.xlu0 %36, %v24
    %v38 = vpop.permute.xlu0 %37
    %vm39 = vcmp.eq.s32.totalorder %v26, %v29
    %vm40 = vcmp.eq.s32.totalorder %v26, %v32
    %vm41 = vcmp.eq.s32.totalorder %v26, %v35
    %vm42 = vcmp.eq.s32.totalorder %v26, %v38
    %v43 = vsel %vm39, 1, 0
    %v44 = vsel %vm40, 1, 0
    %v45 = vsel %vm41, 1, 0
    %v46 = vsel %vm42, 1, 0
    %v47 = vcvt.s32.f32 %v43
    %v48 = vcvt.s32.f32 %v44
    %v49 = vcvt.s32.f32 %v45
    %v50 = vcvt.s32.f32 %v46
    %vm51 = vcmask 531456
    %v53 = vsel %vm51, %v47, 0
    %v56 = vsel %vm51, %v48, 0
    %v59 = vsel %vm51, %v49, 0
    %v62 = vsel %vm51, %v50, 0
    %vm64 = vcmask 1040384
    %v66 = vsel %vm64, %v20, 0
    %68 = vmatprep.subr.mxu0 0.0
    %69 = vmatpush1.msra.mxu0 0.0
    %70 = vmatprep.subr.mxu0 0.0
    %71 = vmatpush1.msra.mxu0 0.0
    %72 = vmatprep.subr.mxu0 0.0
    %73 = vmatpush1.msra.mxu0 0.0
    %74 = vmatprep.subr.mxu0 0.0
    %75 = vmatpush1.msra.mxu0 0.0
    %76 = vmatprep.subr.mxu0 0.0
    %77 = vmatpush1.msra.mxu0 0.0
    %78 = vmatprep.subr.mxu0 0.0
    %79 = vmatpush1.msra.mxu0 0.0
    %80 = vmatprep.subr.mxu0 0.0
    %81 = vmatpush1.msra.mxu0 0.0
    %82 = vmatprep.subr.mxu0 0.0
    %83 = vmatpush1.msra.mxu0 %v66
    %84 = vmatprep.subr.mxu0 0.0
    %85 = vmatpush1.msra.mxu0 %v19
    %86 = vmatprep.subr.mxu0 0.0
    %87 = vmatpush1.msra.mxu0 %v18
    %88 = vmatprep.subr.mxu0 0.0
    %89 = vmatpush1.msra.mxu0 %v17
    %90 = vmatprep.subr.mxu0 0.0
    %91 = vmatpush1.msra.mxu0 %v16
    %92 = vmatprep.subr.mxu0 0.0
    %93 = vmatpush1.msra.mxu0 %v15
    %94 = vmatprep.subr.mxu0 0.0
    %95 = vmatpush1.msra.mxu0 %v14
    %96 = vmatprep.subr.mxu0 0.0
    %97 = vmatpush1.msra.mxu0 %v13
    %98 = vmatprep.subr.mxu0 0.0
    %99 = vmatpush1.msra.mxu0 %v12
    %100 = vmatprep.subr.mxu0 0.0
    %101 = vmatpush2.msra.mxu0 0.0
    %102 = vmatprep.subr.mxu0 0.0
    %103 = vmatpush2.msra.mxu0 0.0
    %104 = vmatprep.subr.mxu0 0.0
    %105 = vmatpush2.msra.mxu0 0.0
    %106 = vmatprep.subr.mxu0 0.0
    %107 = vmatpush2.msra.mxu0 0.0
    %108 = vmatprep.subr.mxu0 0.0
    %109 = vmatpush2.msra.mxu0 0.0
    %110 = vmatprep.subr.mxu0 0.0
    %111 = vmatpush2.msra.mxu0 0.0
    %112 = vmatprep.subr.mxu0 0.0
    %113 = vmatpush2.msra.mxu0 0.0
    %114 = vmatprep.subr.mxu0 0.0
    %115 = vmatpush2.msra.mxu0 0.0
    %116 = vmatprep.subr.mxu0 0.0
    %117 = vmatpush2.msra.mxu0 0.0
    %118 = vmatprep.subr.mxu0 0.0
    %119 = vmatpush2.msra.mxu0 0.0
    %120 = vmatprep.subr.mxu0 0.0
    %121 = vmatpush2.msra.mxu0 0.0
    %122 = vmatprep.subr.mxu0 0.0
    %123 = vmatpush2.msra.mxu0 0.0
    %124 = vmatprep.subr.mxu0 0.0
    %125 = vmatpush2.msra.mxu0 0.0
    %126 = vmatprep.subr.mxu0 0.0
    %127 = vmatpush2.msra.mxu0 0.0
    %128 = vmatprep.subr.mxu0 0.0
    %129 = vmatpush2.msra.mxu0 0.0
    %130 = vmatprep.subr.mxu0 0.0
    %131 = vmatpush2.msra.mxu0 0.0
    %132 = vmatprep.mubr.f32.mxu0 0.0
    %133 = vmatmul.mubr.f32.gmra.mxu0 %v53
    %v134 = vpop.f32.mrf.mxu0
    %v135 = vadd.f32 0.0, %v134
    %v136 = vpop.f32.mrf.mxu0
    %137 = vmatprep.mubr.f32.mxu0 0.0
    %138 = vmatmul.mubr.f32.gmra.mxu0 %v56
    %v139 = vpop.f32.mrf.mxu0
    %v140 = vadd.f32 0.0, %v139
    %v141 = vpop.f32.mrf.mxu0
    %142 = vmatprep.mubr.f32.mxu0 0.0
    %143 = vmatmul.mubr.f32.gmra.mxu0 %v59
    %v144 = vpop.f32.mrf.mxu0
    %v145 = vadd.f32 0.0, %v144
    %v146 = vpop.f32.mrf.mxu0
    %147 = vmatprep.mubr.f32.mxu0 0.0
    %148 = vmatmul.mubr.f32.gmra.mxu0 %v62
    %v149 = vpop.f32.mrf.mxu0
    %v150 = vadd.f32 0.0, %v149
    %v151 = vpop.f32.mrf.mxu0
    %152 = vdwg.mxu0
    %vm153 = vcmask 261120
    %154 = vst.msk [vmem:[#allocation2] sm:$0xff] %vm153, %v135
    %155 = vst.msk [vmem:[#allocation2 + $0x8] sm:$0xff] %vm153, %v140
    %156 = vst.msk [vmem:[#allocation2 + $0x10] sm:$0xff] %vm153, %v145
    %157 = vst.msk [vmem:[#allocation2 + $0x18] sm:$0xff] %vm153, %v150
    // Predicated region
    $region10: #{tpu_custom_call.1} parent=1 // pred_check
      _
    $region11: #{tpu_custom_call.1} parent=1 // pred_check_branch
      %159 = sbr.rel (0) target = $region13
    $region12: #{tpu_custom_call.1} parent=1 // pred_region
      %s161 = ssub.s32 512, 512
      %162 = vsyncadd [#allocation3], %s161
      %s163 = sshll.u32 [#allocation2], 4
      %s164 = int_to_ptr.vmem [resolvable:$true] %s163
      %169 = dma.vmem_to_hbm [thread:$0]  %s164, 512, %s2, [#allocation3], 128, 128, 8
    $region13: #{tpu_custom_call.1} parent=1 // pred_fallthru
      _
    // Predicated region
    $region14: #{tpu_custom_call.1} parent=1 // pred_check
      _
    $region15: #{tpu_custom_call.1} parent=1 // pred_check_branch
      %171 = sbr.rel (0) target = $region17
    $region16: #{tpu_custom_call.1} parent=1 // pred_region
      %172 = dma.done [#allocation3], 512
    $region17: #{tpu_custom_call.1} parent=1 // pred_fallthru
      _
    %173 = vsyncpa [#allocation3], 1

</llo_original>
